<compile_context>
chip_gen: v6e
topology: v6e:2x2x1
jax: 0.10.0
libtpu: 0.0.40
codegen_flags: <defaults>
</compile_context>

<pallas_src>
import functools
import math

import jax
import jax.numpy as jnp
from jax.experimental import pallas as pl
from jax.experimental.pallas import tpu as pltpu


VMEM_SPEC = pl.BlockSpec(memory_space=pltpu.MemorySpace.VMEM)

CFG = dict(vocab=100, max_pos=16, type_vocab=2, hidden=32, heads=2,
           intermediate=64, layers=2, num_labels=3)

LN_EPS = 1e-12
# Large-but-safe additive mask: exp(-1e9 - max) underflows to exactly 0 (same
# softmax as torch.finfo.min) but cannot generate -inf - (-inf) = NaN even for
# a fully-padded example.
MASK_NEG = -1.0e9


# ----------------------------------------------------------------------------
# In-kernel helpers (pure jnp ops traced inside Mosaic kernel bodies)
# ----------------------------------------------------------------------------
def _layernorm(x, gamma, beta):
    mu = jnp.mean(x, axis=-1, keepdims=True)
    var = jnp.mean((x - mu) ** 2, axis=-1, keepdims=True)
    return (x - mu) * jax.lax.rsqrt(var + LN_EPS) * gamma + beta


def _erf(x):
    # Abramowitz & Stegun 7.1.26 rational approximation (|err| < 1.5e-7).
    # TODO(synk): on v5e the tanh-approx GELU routes to the EUP slot and is
    # cheaper; kept exact-erf for parity with HF "gelu".
    a1, a2, a3, a4, a5 = (0.254829592, -0.284496736, 1.421413741,
                          -1.453152027, 1.061405429)
    p = 0.3275911
    ax = jnp.abs(x)
    t = 1.0 / (1.0 + p * ax)
    poly = ((((a5 * t + a4) * t + a3) * t + a2) * t + a1) * t
    y = 1.0 - poly * jnp.exp(-ax * ax)
    return jnp.where(x < 0.0, -y, y)


def _gelu_exact(x):
    return 0.5 * x * (1.0 + _erf(x * 0.7071067811865476))


def _softmax_xent(logits, labels_col):
    # logits (B, L) f32, labels_col (B, 1) int32 -> (1, 1) mean NLL.
    m = jnp.max(logits, axis=-1, keepdims=True)
    lse = jnp.log(jnp.sum(jnp.exp(logits - m), axis=-1, keepdims=True)) + m
    col = jax.lax.broadcasted_iota(jnp.int32, logits.shape, 1)
    onehot = (col == labels_col).astype(jnp.float32)
    true_logit = jnp.sum(logits * onehot, axis=-1, keepdims=True)
    return jnp.mean(lse - true_logit, axis=0, keepdims=True)


# ----------------------------------------------------------------------------
# Pallas kernels
# ----------------------------------------------------------------------------
def _embed_layernorm_kernel(x_ref, gb_ref, o_ref):
    gb = gb_ref[...]                               # (2, H): [gamma; beta]
    o_ref[...] = _layernorm(x_ref[...], gb[0:1, :], gb[1:2, :])


def _encoder_kernel(nH, Dh, inter, hid_ref, mask_ref, w_ref, ow_ref, vec_ref,
                    out_ref, x_sc):
    """One (example, layer) grid step of the full BERT encoder.

    grid = (B, L): batch axis "parallel", layer axis "arbitrary".  The running
    hidden state for the current example lives in the x_sc VMEM scratch across
    the layer axis; the HBM output block is written only at the last layer.
    """
    H = nH * Dh
    l = pl.program_id(1)
    n_layers = pl.num_programs(1)

    @pl.when(l == 0)
    def _():
        x_sc[...] = hid_ref[0]                     # embedding output (S, H)

    x = x_sc[...]                                  # (S, H) f32
    x_b = x.astype(jnp.bfloat16)

    w = w_ref[0]                                   # (H, 3H + H + I) bf16
    vec = vec_ref[0]                               # (1, 9H + I) f32
    wqkv = w[:, :3 * H]
    ao_w = w[:, 3 * H:4 * H]
    i_w = w[:, 4 * H:4 * H + inter]
    bqkv = vec[:, :3 * H]
    ao_b = vec[:, 3 * H:4 * H]
    a_g = vec[:, 4 * H:5 * H]
    a_b = vec[:, 5 * H:6 * H]
    i_b = vec[:, 6 * H:6 * H + inter]
    o_b = vec[:, 6 * H + inter:7 * H + inter]
    o_g = vec[:, 7 * H + inter:8 * H + inter]
    o_b2 = vec[:, 8 * H + inter:9 * H + inter]

    # Fused QKV projection; 1/sqrt(Dh) already folded into the Q weight/bias.
    qkv = jnp.dot(x_b, wqkv, preferred_element_type=jnp.float32) + bqkv
    mask = mask_ref[0]                             # (1, S) additive key mask

    ctx = []
    for h in range(nH):                            # statically unrolled (tiny)
        q = qkv[:, h * Dh:(h + 1) * Dh].astype(jnp.bfloat16)
        k = qkv[:, H + h * Dh:H + (h + 1) * Dh].astype(jnp.bfloat16)
        v = qkv[:, 2 * H + h * Dh:2 * H + (h + 1) * Dh].astype(jnp.bfloat16)
        # q @ k^T by contracting last axes (no .T relayout).
        s = jax.lax.dot_general(q, k, (((1,), (1,)), ((), ())),
                                preferred_element_type=jnp.float32)
        s = s + mask
        s = s - jnp.max(s, axis=-1, keepdims=True)
        p = jnp.exp(s)
        p = p / jnp.sum(p, axis=-1, keepdims=True)  # exact division (no approx)
        ctx.append(jnp.dot(p.astype(jnp.bfloat16), v,
                           preferred_element_type=jnp.float32))
    # Concatenate heads -> one K=H MXU pass for the output projection.
    ctx = jnp.concatenate(ctx, axis=-1).astype(jnp.bfloat16)     # (S, H)
    attn = jnp.dot(ctx, ao_w, preferred_element_type=jnp.float32) + ao_b
    h1 = _layernorm(attn + x, a_g, a_b)

    ffn_in = jnp.dot(h1.astype(jnp.bfloat16), i_w,
                     preferred_element_type=jnp.float32) + i_b
    ffn_in = _gelu_exact(ffn_in)
    ffn = jnp.dot(ffn_in.astype(jnp.bfloat16), ow_ref[0],
                  preferred_element_type=jnp.float32) + o_b
    new_x = _layernorm(ffn + h1, o_g, o_b2)
    x_sc[...] = new_x

    @pl.when(l == n_layers - 1)
    def _():
        out_ref[0] = new_x


def _pooler_head_kernel(B, NL, H, cls_ref, lab_ref, w_ref, b_ref, slab_ref):
    # Pooler (tanh) + classifier + cross-entropy, all fused; output is a single
    # lane-dense (RPAD, 128) slab: logits in [:B, :NL], loss at [0, NL].
    w = w_ref[...]                                 # (H, H + CPAD) bf16
    b = b_ref[...]                                 # (1, H + CPAD) f32
    x = cls_ref[...].astype(jnp.bfloat16)          # (RPAD, H)
    pooled = jnp.tanh(jnp.dot(x, w[:, :H],
                              preferred_element_type=jnp.float32) + b[:, :H])
    logits_pad = (jnp.dot(pooled.astype(jnp.bfloat16), w[:, H:],
                          preferred_element_type=jnp.float32) + b[:, H:])
    loss = _softmax_xent(logits_pad[:B, :NL], lab_ref[...])
    row = jax.lax.broadcasted_iota(jnp.int32, logits_pad.shape, 0)
    col = jax.lax.broadcasted_iota(jnp.int32, logits_pad.shape, 1)
    slab_ref[...] = jnp.where(jnp.logical_and(row == 0, col == NL),
                              loss, logits_pad)


def _dsn_head_kernel(B, NL, RPAD, hid_ref, lab_ref, cw_ref, cb_ref, slab_ref):
    # dsn branch: sequence-sum pooling of the embedding output + classifier +
    # cross-entropy, fused; same lane-dense slab layout as the pooler head.
    H = hid_ref.shape[2]
    pooled = jnp.sum(hid_ref[...], axis=1)         # (B, H) f32
    if RPAD > B:
        pooled = jnp.concatenate(
            [pooled, jnp.zeros((RPAD - B, H), jnp.float32)], axis=0)
    logits_pad = (jnp.dot(pooled.astype(jnp.bfloat16), cw_ref[...],
                          preferred_element_type=jnp.float32) + cb_ref[...])
    loss = _softmax_xent(logits_pad[:B, :NL], lab_ref[...])
    row = jax.lax.broadcasted_iota(jnp.int32, logits_pad.shape, 0)
    col = jax.lax.broadcasted_iota(jnp.int32, logits_pad.shape, 1)
    slab_ref[...] = jnp.where(jnp.logical_and(row == 0, col == NL),
                              loss, logits_pad)


# ----------------------------------------------------------------------------
# Pallas wrappers
# ----------------------------------------------------------------------------
def embed_layernorm(x, gamma_beta):
    M, H = x.shape
    return pl.pallas_call(
        _embed_layernorm_kernel,
        out_shape=jax.ShapeDtypeStruct((M, H), jnp.float32),
        in_specs=[VMEM_SPEC, VMEM_SPEC],
        out_specs=VMEM_SPEC,
    )(x, gamma_beta)


def bert_encoder(hidden_bsh, add_mask, enc_w, enc_ow, enc_vec, nH, Dh, inter):
    B, S, H = hidden_bsh.shape
    L = enc_w.shape[0]
    W1 = enc_w.shape[2]
    VK = enc_vec.shape[2]
    return pl.pallas_call(
        functools.partial(_encoder_kernel, nH, Dh, inter),
        out_shape=jax.ShapeDtypeStruct((B, S, H), jnp.float32),
        grid_spec=pltpu.PrefetchScalarGridSpec(
            num_scalar_prefetch=0,
            grid=(B, L),
            in_specs=[
                pl.BlockSpec((1, S, H), lambda b, l: (b, 0, 0)),     # embeddings
                pl.BlockSpec((1, 1, S), lambda b, l: (b, 0, 0)),     # key mask row
                pl.BlockSpec((1, H, W1), lambda b, l: (l, 0, 0)),    # qkv|ao|ffn-in
                pl.BlockSpec((1, inter, H), lambda b, l: (l, 0, 0)), # ffn-out
                pl.BlockSpec((1, 1, VK), lambda b, l: (l, 0, 0)),    # biases + LN
            ],
            out_specs=pl.BlockSpec((1, S, H), lambda b, l: (b, 0, 0)),
            scratch_shapes=[pltpu.VMEM((S, H), jnp.float32)],
        ),
        compiler_params=pltpu.CompilerParams(
            dimension_semantics=("parallel", "arbitrary"),
            vmem_limit_bytes=64 * 1024 * 1024),
    )(hidden_bsh, add_mask, enc_w, enc_ow, enc_vec)


def pooler_classifier_head(cls_tok, labels2d, head_w, head_b, num_labels):
    B, H = cls_tok.shape
    RPAD = ((B + 7) // 8) * 8
    CPAD = head_w.shape[1] - H
    cls_pad = jnp.zeros((RPAD, H), jnp.float32).at[:B].set(cls_tok)
    slab = pl.pallas_call(
        functools.partial(_pooler_head_kernel, B, num_labels, H),
        out_shape=jax.ShapeDtypeStruct((RPAD, CPAD), jnp.float32),
        in_specs=[VMEM_SPEC] * 4,
        out_specs=VMEM_SPEC,
    )(cls_pad, labels2d, head_w, head_b)
    return slab[0, num_labels], slab[:B, :num_labels]


def dsn_classifier_head(hidden_bsh, labels2d, cw_pad, cb_pad, num_labels):
    B = hidden_bsh.shape[0]
    RPAD = ((B + 7) // 8) * 8
    CPAD = cw_pad.shape[1]
    slab = pl.pallas_call(
        functools.partial(_dsn_head_kernel, B, num_labels, RPAD),
        out_shape=jax.ShapeDtypeStruct((RPAD, CPAD), jnp.float32),
        in_specs=[VMEM_SPEC] * 4,
        out_specs=VMEM_SPEC,
    )(hidden_bsh, labels2d, cw_pad, cb_pad)
    return slab[0, num_labels], slab[:B, :num_labels]


# ----------------------------------------------------------------------------
# Parameters (packed layout the kernels consume; weights in bf16)
# ----------------------------------------------------------------------------
def init_params(key, cfg):
    std = 0.02
    H, I, L, NL = cfg["hidden"], cfg["intermediate"], cfg["layers"], cfg["num_labels"]
    Dh = H // cfg["heads"]
    scale = 1.0 / math.sqrt(Dh)
    CPAD = max(128, ((NL + 127) // 128) * 128)

    def nrm(k, shape):
        return std * jax.random.normal(k, shape, dtype=jnp.float32)

    keys = iter(jax.random.split(key, 16 * L + 16))

    enc_w, enc_ow, enc_vec = [], [], []
    for _ in range(L):
        q_w, k_w, v_w = (nrm(next(keys), (H, H)), nrm(next(keys), (H, H)),
                         nrm(next(keys), (H, H)))
        ao_w = nrm(next(keys), (H, H))
        i_w = nrm(next(keys), (H, I))
        o_w = nrm(next(keys), (I, H))
        bq, bk, bv = (nrm(next(keys), (H,)), nrm(next(keys), (H,)),
                      nrm(next(keys), (H,)))
        ao_b, i_b, o_b = (nrm(next(keys), (H,)), nrm(next(keys), (I,)),
                          nrm(next(keys), (H,)))
        # Fold the 1/sqrt(Dh) attention scale into Q weight AND Q bias.
        wqkv = jnp.concatenate([q_w * scale, k_w, v_w], axis=1)    # (H, 3H)
        bqkv = jnp.concatenate([bq * scale, bk, bv])               # (3H,)
        enc_w.append(jnp.concatenate([wqkv, ao_w, i_w], axis=1)    # (H, 3H+H+I)
                     .astype(jnp.bfloat16))
        enc_ow.append(o_w.astype(jnp.bfloat16))                    # (I, H)
        enc_vec.append(jnp.concatenate([                           # (1, 9H+I)
            bqkv, ao_b,
            jnp.ones((H,), jnp.float32), jnp.zeros((H,), jnp.float32),  # attn LN
            i_b, o_b,
            jnp.ones((H,), jnp.float32), jnp.zeros((H,), jnp.float32),  # out LN
        ]).astype(jnp.float32).reshape(1, -1))

    pooler_w = nrm(next(keys), (H, H))
    pooler_b = jnp.zeros((H,), jnp.float32)
    cls_w = nrm(next(keys), (H, NL))
    cls_b = jnp.zeros((NL,), jnp.float32)
    cw_pad = jnp.zeros((H, CPAD), jnp.float32).at[:, :NL].set(cls_w)
    cb_pad = jnp.zeros((1, CPAD), jnp.float32).at[:, :NL].set(cls_b)

    return {
        "emb": {
            "word": nrm(next(keys), (cfg["vocab"], H)),
            "pos": nrm(next(keys), (cfg["max_pos"], H)),
            "type": nrm(next(keys), (cfg["type_vocab"], H)),
            "ln_gb": jnp.stack([jnp.ones((H,), jnp.float32),
                                jnp.zeros((H,), jnp.float32)]),    # (2, H)
        },
        "enc_w": jnp.stack(enc_w),        # (L, H, 3H+H+I) bf16
        "enc_ow": jnp.stack(enc_ow),      # (L, I, H)      bf16
        "enc_vec": jnp.stack(enc_vec),    # (L, 1, 9H+I)   f32
        "head_w": jnp.concatenate([pooler_w, cw_pad], axis=1).astype(jnp.bfloat16),
        "head_b": jnp.concatenate([pooler_b.reshape(1, H), cb_pad],
                                  axis=1).astype(jnp.float32),
        "dsn_cw": cw_pad.astype(jnp.bfloat16),
        "dsn_cb": cb_pad.astype(jnp.float32),
    }


# ----------------------------------------------------------------------------
# Model (forward pass of BertForSequenceClassificationPB)
# ----------------------------------------------------------------------------
def forward(params, input_ids, attention_mask, token_type_ids, labels,
            cfg=CFG, dsn=False):
    B, S = input_ids.shape
    H = cfg["hidden"]
    nH = cfg["heads"]
    Dh = H // nH
    I = cfg["intermediate"]
    NL = cfg["num_labels"]

    # --- BERT embeddings (word + position + token-type), then LayerNorm ------
    pos_ids = jnp.arange(S)
    emb = (jnp.take(params["emb"]["word"], input_ids, axis=0)
           + jnp.take(params["emb"]["pos"], pos_ids, axis=0)[None, :, :]
           + jnp.take(params["emb"]["type"], token_type_ids, axis=0))
    hidden = embed_layernorm(emb.reshape(B * S, H), params["emb"]["ln_gb"])
    # embedding dropout (p=0.1) -> identity at inference

    labels2d = labels.reshape(B, 1).astype(jnp.int32)

    if dsn:
        # dsn: pool = sum over sequence of the embedding output (no encoder,
        # no pooler), then classifier + cross-entropy — matches the reference.
        loss, logits = dsn_classifier_head(
            hidden.reshape(B, S, H), labels2d,
            params["dsn_cw"], params["dsn_cb"], NL)
    else:
        # Per-example additive key mask (0 keep / -1e9 drop), O(B*S) only.
        add_mask = ((1.0 - attention_mask.astype(jnp.float32))
                    * MASK_NEG).reshape(B, 1, S)
        hidden = bert_encoder(hidden.reshape(B, S, H), add_mask,
                              params["enc_w"], params["enc_ow"],
                              params["enc_vec"], nH, Dh, I)
        cls_tok = hidden[:, 0, :]
        loss, logits = pooler_classifier_head(
            cls_tok, labels2d, params["head_w"], params["head_b"], NL)

    # classifier-head dropout (p=0.1) -> identity at inference
    return loss, logits


# ----------------------------------------------------------------------------
# Demo
# ----------------------------------------------------------------------------
if __name__ == "__main__":
    key = jax.random.PRNGKey(0)
    pkey, ikey, lkey = jax.random.split(key, 3)

    B, S = 2, 8
    params = init_params(pkey, CFG)

    input_ids = jax.random.randint(ikey, (B, S), 0, CFG["vocab"], dtype=jnp.int32)
    attention_mask = jnp.ones((B, S), jnp.int32).at[1, 6:].set(0)
    token_type_ids = jnp.zeros((B, S), jnp.int32).at[:, 4:].set(1)
    labels = jax.random.randint(lkey, (B,), 0, CFG["num_labels"], dtype=jnp.int32)

    # full-BERT branch (dsn=False)
    loss, logits = forward(params, input_ids, attention_mask, token_type_ids,
                           labels, dsn=False)
    jax.block_until_ready((loss, logits))

    # embeddings-only branch (dsn=True)
    loss_dsn, logits_dsn = forward(params, input_ids, attention_mask,
                                   token_type_ids, labels, dsn=True)
    jax.block_until_ready((loss_dsn, logits_dsn))

    assert logits.shape == (B, CFG["num_labels"]) and loss.shape == ()
    assert logits_dsn.shape == (B, CFG["num_labels"]) and loss_dsn.shape == ()
    assert jnp.isfinite(loss) and jnp.isfinite(loss_dsn)
    assert bool(jnp.all(jnp.isfinite(logits))) and bool(jnp.all(jnp.isfinite(logits_dsn)))
    print("KERNEL_OK")
</pallas_src>

<mosaic_0001>
module attributes {stable_mosaic.version = 11 : i64} {
  func.func @_embed_layernorm_kernel(%arg0: memref<16x32xf32, #tpu.memory_space<vmem>>, %arg1: memref<2x32xf32, #tpu.memory_space<vmem>>, %arg2: memref<16x32xf32, #tpu.memory_space<vmem>>) attributes {dimension_semantics = [], scalar_prefetch = 0 : i64, scratch_operands = 0 : i64, tpu.core_type = #tpu.core_type<tc>} {
    %c0 = arith.constant 0 : index
    %c0_0 = arith.constant 0 : index
    %0 = vector.load %arg1[%c0, %c0_0] : memref<2x32xf32, #tpu.memory_space<vmem>>, vector<2x32xf32>
    %c0_1 = arith.constant 0 : index
    %c0_2 = arith.constant 0 : index
    %1 = vector.load %arg0[%c0_1, %c0_2] : memref<16x32xf32, #tpu.memory_space<vmem>>, vector<16x32xf32>
    %2 = vector.extract_strided_slice %0 {offsets = [0, 0], sizes = [1, 32], strides = [1, 1]} : vector<2x32xf32> to vector<1x32xf32>
    %3 = vector.extract_strided_slice %0 {offsets = [1, 0], sizes = [1, 32], strides = [1, 1]} : vector<2x32xf32> to vector<1x32xf32>
    %cst = arith.constant dense<0.000000e+00> : vector<16xf32>
    %4 = vector.multi_reduction <add>, %1, %cst [1] : vector<16x32xf32> to vector<16xf32>
    %5 = vector.shape_cast %4 : vector<16xf32> to vector<16x1xf32>
    %cst_3 = arith.constant 3.200000e+01 : f32
    %6 = vector.broadcast %cst_3 : f32 to vector<16x1xf32>
    %7 = arith.divf %5, %6 : vector<16x1xf32>
    %8 = vector.broadcast %7 : vector<16x1xf32> to vector<16x32xf32>
    %9 = arith.subf %1, %8 : vector<16x32xf32>
    %10 = arith.mulf %9, %9 : vector<16x32xf32>
    %cst_4 = arith.constant dense<0.000000e+00> : vector<16xf32>
    %11 = vector.multi_reduction <add>, %10, %cst_4 [1] : vector<16x32xf32> to vector<16xf32>
    %12 = vector.shape_cast %11 : vector<16xf32> to vector<16x1xf32>
    %cst_5 = arith.constant 3.200000e+01 : f32
    %13 = vector.broadcast %cst_5 : f32 to vector<16x1xf32>
    %14 = arith.divf %12, %13 : vector<16x1xf32>
    %15 = vector.broadcast %7 : vector<16x1xf32> to vector<16x32xf32>
    %16 = arith.subf %1, %15 : vector<16x32xf32>
    %cst_6 = arith.constant 9.99999996E-13 : f32
    %17 = vector.broadcast %cst_6 : f32 to vector<16x1xf32>
    %18 = arith.addf %14, %17 : vector<16x1xf32>
    %19 = math.rsqrt %18 : vector<16x1xf32>
    %20 = vector.broadcast %19 : vector<16x1xf32> to vector<16x32xf32>
    %21 = arith.mulf %16, %20 : vector<16x32xf32>
    %22 = vector.broadcast %2 : vector<1x32xf32> to vector<16x32xf32>
    %23 = arith.mulf %21, %22 : vector<16x32xf32>
    %24 = vector.broadcast %3 : vector<1x32xf32> to vector<16x32xf32>
    %25 = arith.addf %23, %24 : vector<16x32xf32>
    %c0_7 = arith.constant 0 : index
    %c0_8 = arith.constant 0 : index
    %26 = vector.load %arg2[%c0_7, %c0_8] : memref<16x32xf32, #tpu.memory_space<vmem>>, vector<16x32xf32>
    tpu.vector_store %arg2[%c0_7, %c0_8], %25 {strides = array<i32>} : memref<16x32xf32, #tpu.memory_space<vmem>>, vector<16x32xf32>,
    return
  }
}

</mosaic_0001>

<llo_original>
// kernel: tpu_custom_call.1
$region0: #{tpu_custom_call.1}
  #allocation0 [shape = 'u32[]', space=smem, size = 0x4, offset = 0x4, fixed_abs, tag = 'smem constant byte address 0x4 - core index']
  #allocation1 [shape = 'u32[144,128]{1,0:T(1,128)}', space=vmem, size = 0x12000, scoped, tag = 'internal scratch']
  %s0 = inlined_call_operand.hbm [shape: f32[16,32], index: 0, kind: input, shape index: {}]
  %s1 = inlined_call_operand.hbm [shape: f32[2,32], index: 1, kind: input, shape index: {}]
  %s2 = inlined_call_operand.hbm [shape: f32[16,32], index: 2, kind: output, shape index: {}]
  %s3 = sld [smem:[#allocation0]]
  $region26: #{tpu_custom_call.1} parent=0
    _
  %s5 = ssub.s32 1, %s3
  %s6 = scalar_select 0, %s5, %s3
  $region1: #{tpu_custom_call.1} parent=0
    #allocation2 [shape = 'u8[8192]{0}', space=vmem, size = 0x2000, scoped, tag = 'input window, operand 0, single buffered']
    #allocation3 [shape = 's32[1]{0}', space=sflag, size = 0x4, scoped, tag = 'scoped memory for tpu_custom_call.1']
    #allocation4 [shape = 's32[1]{0}', space=sflag, size = 0x4, scoped, tag = 'scoped memory for tpu_custom_call.1']
    #allocation5 [shape = 'u8[1024]{0}', space=vmem, size = 0x400, scoped, tag = 'input window, operand 1, single buffered']
    #allocation6 [shape = 's32[1]{0}', space=sflag, size = 0x4, scoped, tag = 'scoped memory for tpu_custom_call.1']
    #allocation7 [shape = 'u8[8192]{0}', space=vmem, size = 0x2000, scoped, tag = 'output window, operand 0, single buffered']
    %7 = vsyncpa [#allocation3], 0
    %8 = vsyncpa [#allocation6], 0
    %9 = vsyncpa [#allocation4], 0
    // Predicated region
    $region2: #{tpu_custom_call.1} parent=1 // pred_check
      _
    $region3: #{tpu_custom_call.1} parent=1 // pred_check_branch
      %11 = sbr.rel (0) target = $region5
    $region4: #{tpu_custom_call.1} parent=1 // pred_region
      %s13 = ssub.s32 256, 256
      %14 = vsyncadd [#allocation3], %s13
      %s15 = sshll.u32 [#allocation2], 4
      %s16 = int_to_ptr.vmem [resolvable:$true] %s15
      %21 = dma.hbm_to_vmem [thread:$0]  %s0, 256, %s16, [#allocation3], 128, 128, 8
    $region5: #{tpu_custom_call.1} parent=1 // pred_fallthru
      _
    // Predicated region
    $region6: #{tpu_custom_call.1} parent=1 // pred_check
      _
    $region7: #{tpu_custom_call.1} parent=1 // pred_check_branch
      %23 = sbr.rel (0) target = $region9
    $region8: #{tpu_custom_call.1} parent=1 // pred_region
      %s25 = ssub.s32 32, 32
      %26 = vsyncadd [#allocation6], %s25
      %s28 = sshll.u32 [#allocation5], 4
      %s29 = int_to_ptr.vmem [resolvable:$true] %s28
      %31 = dma.hbm_to_vmem [thread:$0]  %s1, 32, %s29, [#allocation6]
    $region9: #{tpu_custom_call.1} parent=1 // pred_fallthru
      _
    // Predicated region
    $region10: #{tpu_custom_call.1} parent=1 // pred_check
      _
    $region11: #{tpu_custom_call.1} parent=1 // pred_check_branch
      %33 = sbr.rel (0) target = $region13
    $region12: #{tpu_custom_call.1} parent=1 // pred_region
      %34 = dma.done [#allocation3], 256
    $region13: #{tpu_custom_call.1} parent=1 // pred_fallthru
      _
    // Predicated region
    $region14: #{tpu_custom_call.1} parent=1 // pred_check
      _
    $region15: #{tpu_custom_call.1} parent=1 // pred_check_branch
      %36 = sbr.rel (0) target = $region17
    $region16: #{tpu_custom_call.1} parent=1 // pred_region
      %37 = dma.done [#allocation6], 32
    $region17: #{tpu_custom_call.1} parent=1 // pred_fallthru
      _
    %v38 = vld [vmem:[#allocation5] sm:$0x3]
    %v39 = vld [vmem:[#allocation2] sm:$0xff]
    %v40 = vld [vmem:[#allocation2 + $0x8] sm:$0xff]
    %vm41 = vcmask 261120
    %v42 = vsel %vm41, %v39, 0.0
    %43 = vadd.xlane.f32.xlu0 %v42
    %v44 = vpop.xlane.xlu0 %43
    %v45 = vsel %vm41, %v40, 0.0
    %46 = vadd.xlane.f32.xlu0 %v45
    %v47 = vpop.xlane.xlu0 %46
    %v48 = vrcp.pop 32.0
    %v49 = vmul.f32 %v44, %v48
    %v50 = vmul.f32 %v47, %v48
    %v51 = vsub.f32 %v39, %v49
    %v52 = vsub.f32 %v40, %v50
    %v53 = vmul.f32 %v51, %v51
    %v54 = vmul.f32 %v52, %v52
    %v55 = vsel %vm41, %v53, 0.0
    %56 = vadd.xlane.f32.xlu0 %v55
    %v57 = vpop.xlane.xlu0 %56
    %v58 = vsel %vm41, %v54, 0.0
    %59 = vadd.xlane.f32.xlu0 %v58
    %v60 = vpop.xlane.xlu0 %59
    %v61 = vmul.f32 %v57, %v48
    %v62 = vmul.f32 %v60, %v48
    %v63 = vadd.f32 %v61, 1e-12
    %v64 = vadd.f32 %v62, 1e-12
    %v65 = vrsqrt.pop %v63
    %v66 = vrsqrt.pop %v64
    %v67 = vmul.f32 %v51, %v65
    %v68 = vmul.f32 %v52, %v66
    %v69 = vlaneseq
    %v70 = vshrl.u32 %v69, 7
    %v71 = vsub.s32 0, %v70
    %v72 = vrot.slane %v38, %v71
    %v73 = vmul.f32 %v67, %v72
    %v74 = vmul.f32 %v68, %v72
    %v75 = vlaneseq
    %v76 = vshrl.u32 %v75, 7
    %v77 = vsub.s32 1, %v76
    %v78 = vrot.slane %v38, %v77
    %v79 = vadd.f32 %v73, %v78
    %v80 = vadd.f32 %v74, %v78
    %81 = vst.msk [vmem:[#allocation7] sm:$0xff] %vm41, %v79
    %82 = vst.msk [vmem:[#allocation7 + $0x8] sm:$0xff] %vm41, %v80
    // Predicated region
    $region18: #{tpu_custom_call.1} parent=1 // pred_check
      _
    $region19: #{tpu_custom_call.1} parent=1 // pred_check_branch
      %84 = sbr.rel (0) target = $region21
    $region20: #{tpu_custom_call.1} parent=1 // pred_region
      %s86 = ssub.s32 256, 256
      %87 = vsyncadd [#allocation4], %s86
      %s88 = sshll.u32 [#allocation7], 4
      %s89 = int_to_ptr.vmem [resolvable:$true] %s88
      %94 = dma.vmem_to_hbm [thread:$0]  %s89, 256, %s2, [#allocation4], 128, 128, 8
    $region21: #{tpu_custom_call.1} parent=1 // pred_fallthru
      _
    // Predicated region
    $region22: #{tpu_custom_call.1} parent=1 // pred_check
      _
    $region23: #{tpu_custom_call.1} parent=1 // pred_check_branch
      %96 = sbr.rel (0) target = $region25
    $region24: #{tpu_custom_call.1} parent=1 // pred_region
      %97 = dma.done [#allocation4], 256
    $region25: #{tpu_custom_call.1} parent=1 // pred_fallthru
      _
    %98 = vsyncpa [#allocation3], 1
    %99 = vsyncpa [#allocation6], 1
    %100 = vsyncpa [#allocation4], 1

</llo_original>
